<compile_context>
chip_gen: v6e
topology: v6e:2x2x1
jax: 0.10.0
libtpu: 0.0.40
codegen_flags: <defaults>
</compile_context>

<pallas_src>
import functools

import jax
import jax.numpy as jnp
from jax import lax
from jax.experimental import pallas as pl
from jax.experimental.pallas import tpu as pltpu


_LANE = 128
_SUBLANE = 8


def _round_up(x, m):
    return ((x + m - 1) // m) * m


def _svi_partial_kernel(yp_ref, yt_ref, mu_ref, sig_ref, out_ref, *,
                        n_rows, tile_b, needs_mask):
    """One grid step reduces its (tile_b, D)/(tile_b, Z) blocks to two scalar
    partial sums (BCE-sum, KLD-sum) and stores them in its own output block.
    No cross-step carry -> the batch grid axis is fully parallel."""
    yp = yp_ref[...].astype(jnp.float32)
    yt = yt_ref[...].astype(jnp.float32)
    mu = mu_ref[...].astype(jnp.float32)
    sig = sig_ref[...].astype(jnp.float32)

    if needs_mask:
        # Mask the ragged batch tail in-kernel (replaces the old jnp.pad copies).
        row0 = pl.program_id(0) * tile_b
        row_ids = row0 + lax.broadcasted_iota(jnp.int32, (tile_b, 1), 0)
        valid = row_ids < n_rows  # (tile_b, 1), broadcasts over lanes
        # Select neutral values BEFORE the logs so garbage tail rows contribute
        # exactly 0 and can never produce NaN (NaN * 0 = NaN otherwise):
        #   BCE(yp=1, yt=1) = 0,   KLD term(mu=0, sigma=1) = 1 + 0 - 0 - 1 = 0
        yp = jnp.where(valid, yp, 1.0)
        yt = jnp.where(valid, yt, 1.0)
        mu = jnp.where(valid, mu, 0.0)
        sig = jnp.where(valid, sig, 1.0)

    # torch.nn.BCELoss clamps each log term at -100. Clamp BEFORE the multiply
    # so 0 * (-inf)-style NaNs can never appear.
    log_p = jnp.maximum(jnp.log(yp), -100.0)
    log_1mp = jnp.maximum(jnp.log(1.0 - yp), -100.0)
    # yt*log_p + (1-yt)*log_1mp  ==  log_1mp + yt*(log_p - log_1mp)  (fewer VPU ops)
    bce_partial = -jnp.sum(log_1mp + yt * (log_p - log_1mp))

    sig2 = sig * sig
    # Single fused reduction over both axes; the /N (batch mean) happens outside.
    kld_partial = -0.5 * jnp.sum(1.0 + jnp.log(sig2) - mu * mu - sig2)

    sub = lax.broadcasted_iota(jnp.int32, (1, _SUBLANE, _LANE), 1)
    lane = lax.broadcasted_iota(jnp.int32, (1, _SUBLANE, _LANE), 2)
    first_row = sub == 0
    out_ref[...] = (jnp.where(first_row & (lane == 0), bce_partial, 0.0)
                    + jnp.where(first_row & (lane == 1), kld_partial, 0.0))


def svi_loss(y_pred, y_true, mu, sigma, *, tile_b=None,
             input_buffer_budget_bytes=12 * 1024 * 1024,
             max_tile_rows=1024):
    """Pallas-accelerated SVI.loss_function (loss_function='BCE').

    y_pred / y_true: (N, D) decoder output / flattened targets, values in (0, 1].
    mu / sigma:      (N, Z) encoder outputs (sigma > 0).
    """
    N, D = y_pred.shape
    _, Z = mu.shape

    # Size the batch tile so (2 pipeline buffers) x (all 4 input blocks) stays
    # within a conservative budget that fits every TPU generation's scoped VMEM.
    row_bytes = (D * (y_pred.dtype.itemsize + y_true.dtype.itemsize)
                 + Z * (mu.dtype.itemsize + sigma.dtype.itemsize))
    if tile_b is None:
        cap = (input_buffer_budget_bytes // (2 * row_bytes)) // _SUBLANE * _SUBLANE
        cap = max(_SUBLANE, cap)
        # No roofline gain past ~1K rows; keeps VMEM modest on v7x (64 MiB/TC)
        # even when bf16 inputs make the byte-based cap explode.
        cap = min(cap, max_tile_rows)
        # Guarantee >= 2 grid tiles whenever N allows it so the 'parallel' axis
        # can shard across both TensorCores on v7x (no effect on 1-TC v5e/v6e).
        two_tile_cap = max(_SUBLANE, _round_up(pl.cdiv(N, 2), _SUBLANE))
        tile_b = min(cap, two_tile_cap, _round_up(N, _SUBLANE))
    tile_b = max(_SUBLANE, _round_up(tile_b, _SUBLANE))

    num_tiles = pl.cdiv(N, tile_b)
    needs_mask = (N % tile_b) != 0

    kernel = functools.partial(_svi_partial_kernel,
                               n_rows=N, tile_b=tile_b, needs_mask=needs_mask)

    partials = pl.pallas_call(
        kernel,
        out_shape=jax.ShapeDtypeStruct((num_tiles, _SUBLANE, _LANE), jnp.float32),
        grid_spec=pltpu.PrefetchScalarGridSpec(
            num_scalar_prefetch=0,
            grid=(num_tiles,),
            in_specs=[
                # Last block dim equals the full array dim (D / Z), so no lane
                # padding / HBM-inflating copies are needed for unaligned shapes.
                pl.BlockSpec((tile_b, D), lambda i: (i, 0)),  # y_pred
                pl.BlockSpec((tile_b, D), lambda i: (i, 0)),  # y_true
                pl.BlockSpec((tile_b, Z), lambda i: (i, 0)),  # mu
                pl.BlockSpec((tile_b, Z), lambda i: (i, 0)),  # sigma
            ],
            out_specs=pl.BlockSpec((1, _SUBLANE, _LANE), lambda i: (i, 0, 0)),
        ),
        compiler_params=pltpu.CompilerParams(
            dimension_semantics=("parallel",),   # independent tiles -> megacore OK
            vmem_limit_bytes=32 * 1024 * 1024,
        ),
    )(y_pred, y_true, mu, sigma)

    # Tiny final combine in plain JAX (num_tiles scalars each).
    bce_total = jnp.sum(partials[:, 0, 0])
    kld_total = jnp.sum(partials[:, 0, 1])
    return bce_total + kld_total / jnp.float32(N)


def svi_loss_ref(y_pred, y_true, mu, sigma):
    """Pure-JAX reference reproducing the PyTorch semantics."""
    log_p = jnp.maximum(jnp.log(y_pred), -100.0)
    log_1mp = jnp.maximum(jnp.log(1.0 - y_pred), -100.0)
    bce = -jnp.sum(y_true * log_p + (1.0 - y_true) * log_1mp)
    kld = -0.5 * jnp.mean(
        jnp.sum(1.0 + jnp.log(sigma ** 2) - mu ** 2 - sigma ** 2, axis=1)
    )
    return bce + kld


# TODO(synk): SVI.forward's epoch/optimizer/dataloader training loop (Adam steps,
# schedulers, tensorboard logging) and the VAE model itself have no Pallas
# equivalent and are not kernels. On v7x, if the bundle shows the EUP (log) slot
# binding instead of HBM, the right fix is a BCE-with-logits path fused into the
# decoder epilogue, not further tuning of this kernel.

if __name__ == "__main__":
    key = jax.random.PRNGKey(0)
    key_a, key_b = jax.random.split(key)

    def make_inputs(k, N, D, Z):
        k1, k2, k3, k4 = jax.random.split(k, 4)
        y_pred = jax.nn.sigmoid(jax.random.normal(k1, (N, D), jnp.float32))  # decoder output in (0,1)
        y_true = jax.random.uniform(k2, (N, D), jnp.float32)                 # targets in [0,1]
        mu = 0.5 * jax.random.normal(k3, (N, Z), jnp.float32)                # encoder mean
        sigma = jnp.exp(0.2 * jax.random.normal(k4, (N, Z), jnp.float32))    # encoder std > 0
        return y_pred, y_true, mu, sigma

    # Lane-aligned case: batch=16, 1x16x16 image -> D=256, latent Z=128.
    inputs_aligned = make_inputs(key_a, 16, 256, 128)
    loss = jax.block_until_ready(svi_loss(*inputs_aligned))
    loss_ref = jax.block_until_ready(svi_loss_ref(*inputs_aligned))
    assert jnp.allclose(loss, loss_ref, rtol=1e-3, atol=1e-2), (loss, loss_ref)

    # Ragged / unaligned case: batch=10, D=200, Z=20 — exercises the in-kernel
    # batch-tail masking and the full-dim (non-128) feature/latent blocks.
    inputs_ragged = make_inputs(key_b, 10, 200, 20)
    loss_r = jax.block_until_ready(svi_loss(*inputs_ragged))
    loss_r_ref = jax.block_until_ready(svi_loss_ref(*inputs_ragged))
    assert jnp.allclose(loss_r, loss_r_ref, rtol=1e-3, atol=1e-2), (loss_r, loss_r_ref)

    print("KERNEL_OK")
</pallas_src>

<mosaic_0001>
module attributes {stable_mosaic.version = 11 : i64} {
  func.func @_svi_partial_kernel(%arg0: i32, %arg1: memref<8x256xf32, #tpu.memory_space<vmem>>, %arg2: memref<8x256xf32, #tpu.memory_space<vmem>>, %arg3: memref<8x128xf32, #tpu.memory_space<vmem>>, %arg4: memref<8x128xf32, #tpu.memory_space<vmem>>, %arg5: memref<1x8x128xf32, #tpu.memory_space<vmem>>) attributes {dimension_semantics = [#tpu.dimension_semantics<parallel>], iteration_bounds = array<i64: 2>, scalar_prefetch = 0 : i64, scratch_operands = 0 : i64, tpu.core_type = #tpu.core_type<tc>, window_params = [{transform_indices = @transform_0, window_bounds = array<i64: 8, 256>}, {transform_indices = @transform_1, window_bounds = array<i64: 8, 256>}, {transform_indices = @transform_2, window_bounds = array<i64: 8, 128>}, {transform_indices = @transform_3, window_bounds = array<i64: 8, 128>}, {transform_indices = @transform_4, window_bounds = array<i64: 1, 8, 128>}]} {
    %c0 = arith.constant 0 : index
    %c0_0 = arith.constant 0 : index
    %0 = vector.load %arg1[%c0, %c0_0] : memref<8x256xf32, #tpu.memory_space<vmem>>, vector<8x256xf32>
    %c0_1 = arith.constant 0 : index
    %c0_2 = arith.constant 0 : index
    %1 = vector.load %arg2[%c0_1, %c0_2] : memref<8x256xf32, #tpu.memory_space<vmem>>, vector<8x256xf32>
    %c0_3 = arith.constant 0 : index
    %c0_4 = arith.constant 0 : index
    %2 = vector.load %arg3[%c0_3, %c0_4] : memref<8x128xf32, #tpu.memory_space<vmem>>, vector<8x128xf32>
    %c0_5 = arith.constant 0 : index
    %c0_6 = arith.constant 0 : index
    %3 = vector.load %arg4[%c0_5, %c0_6] : memref<8x128xf32, #tpu.memory_space<vmem>>, vector<8x128xf32>
    %4 = math.log %0 : vector<8x256xf32>
    %cst = arith.constant -1.000000e+02 : f32
    %5 = vector.broadcast %cst : f32 to vector<8x256xf32>
    %6 = arith.maximumf %4, %5 : vector<8x256xf32>
    %cst_7 = arith.constant 1.000000e+00 : f32
    %7 = vector.broadcast %cst_7 : f32 to vector<8x256xf32>
    %8 = arith.subf %7, %0 : vector<8x256xf32>
    %9 = math.log %8 : vector<8x256xf32>
    %cst_8 = arith.constant -1.000000e+02 : f32
    %10 = vector.broadcast %cst_8 : f32 to vector<8x256xf32>
    %11 = arith.maximumf %9, %10 : vector<8x256xf32>
    %12 = arith.subf %6, %11 : vector<8x256xf32>
    %13 = arith.mulf %1, %12 : vector<8x256xf32>
    %14 = arith.addf %11, %13 : vector<8x256xf32>
    %15 = vector.shape_cast %14 : vector<8x256xf32> to vector<1x8x256xf32>
    %cst_9 = arith.constant dense<0.000000e+00> : vector<1xf32>
    %16 = vector.multi_reduction <add>, %15, %cst_9 [1, 2] : vector<1x8x256xf32> to vector<1xf32>
    %17 = vector.shape_cast %16 : vector<1xf32> to vector<1x1x1xf32>
    %18 = vector.extract %17[0, 0, 0] : f32 from vector<1x1x1xf32>
    %cst_10 = arith.constant 0.000000e+00 : f32
    %19 = arith.subf %cst_10, %18 : f32
    %20 = arith.mulf %3, %3 : vector<8x128xf32>
    %21 = math.log %20 : vector<8x128xf32>
    %cst_11 = arith.constant 1.000000e+00 : f32
    %22 = vector.broadcast %cst_11 : f32 to vector<8x128xf32>
    %23 = arith.addf %22, %21 : vector<8x128xf32>
    %24 = arith.mulf %2, %2 : vector<8x128xf32>
    %25 = arith.subf %23, %24 : vector<8x128xf32>
    %26 = arith.subf %25, %20 : vector<8x128xf32>
    %27 = vector.shape_cast %26 : vector<8x128xf32> to vector<1x8x128xf32>
    %cst_12 = arith.constant dense<0.000000e+00> : vector<1xf32>
    %28 = vector.multi_reduction <add>, %27, %cst_12 [1, 2] : vector<1x8x128xf32> to vector<1xf32>
    %29 = vector.shape_cast %28 : vector<1xf32> to vector<1x1x1xf32>
    %30 = vector.extract %29[0, 0, 0] : f32 from vector<1x1x1xf32>
    %cst_13 = arith.constant -5.000000e-01 : f32
    %31 = arith.mulf %cst_13, %30 : f32
    %32 = tpu.iota {dimensions = array<i32: 1>} : vector<1x8x128xi32>
    %33 = tpu.iota {dimensions = array<i32: 2>} : vector<1x8x128xi32>
    %c0_i32 = arith.constant 0 : i32
    %34 = vector.broadcast %c0_i32 : i32 to vector<1x8x128xi32>
    %35 = arith.cmpi eq, %32, %34 : vector<1x8x128xi32>
    %c0_i32_14 = arith.constant 0 : i32
    %36 = vector.broadcast %c0_i32_14 : i32 to vector<1x8x128xi32>
    %37 = arith.cmpi eq, %33, %36 : vector<1x8x128xi32>
    %38 = arith.andi %35, %37 : vector<1x8x128xi1>
    %cst_15 = arith.constant 0.000000e+00 : f32
    %39 = vector.broadcast %19 : f32 to vector<1x8x128xf32>
    %40 = vector.broadcast %cst_15 : f32 to vector<1x8x128xf32>
    %41 = arith.select %38, %39, %40 : vector<1x8x128xi1>, vector<1x8x128xf32>
    %c1_i32 = arith.constant 1 : i32
    %42 = vector.broadcast %c1_i32 : i32 to vector<1x8x128xi32>
    %43 = arith.cmpi eq, %33, %42 : vector<1x8x128xi32>
    %44 = arith.andi %35, %43 : vector<1x8x128xi1>
    %cst_16 = arith.constant 0.000000e+00 : f32
    %45 = vector.broadcast %31 : f32 to vector<1x8x128xf32>
    %46 = vector.broadcast %cst_16 : f32 to vector<1x8x128xf32>
    %47 = arith.select %44, %45, %46 : vector<1x8x128xi1>, vector<1x8x128xf32>
    %48 = arith.addf %41, %47 : vector<1x8x128xf32>
    %c0_17 = arith.constant 0 : index
    %c0_18 = arith.constant 0 : index
    %c0_19 = arith.constant 0 : index
    %49 = vector.load %arg5[%c0_17, %c0_18, %c0_19] : memref<1x8x128xf32, #tpu.memory_space<vmem>>, vector<1x8x128xf32>
    tpu.vector_store %arg5[%c0_17, %c0_18, %c0_19], %48 {strides = array<i32>} : memref<1x8x128xf32, #tpu.memory_space<vmem>>, vector<1x8x128xf32>,
    return
  }
  func.func @transform_0(%arg0: i32) -> (i32, i32) {
    %c0_i32 = arith.constant 0 : i32
    %c0_i32_0 = arith.constant 0 : i32
    return %arg0, %c0_i32 : i32, i32
  }
  func.func @transform_1(%arg0: i32) -> (i32, i32) {
    %c0_i32 = arith.constant 0 : i32
    %c0_i32_0 = arith.constant 0 : i32
    return %arg0, %c0_i32 : i32, i32
  }
  func.func @transform_2(%arg0: i32) -> (i32, i32) {
    %c0_i32 = arith.constant 0 : i32
    %c0_i32_0 = arith.constant 0 : i32
    return %arg0, %c0_i32 : i32, i32
  }
  func.func @transform_3(%arg0: i32) -> (i32, i32) {
    %c0_i32 = arith.constant 0 : i32
    %c0_i32_0 = arith.constant 0 : i32
    return %arg0, %c0_i32 : i32, i32
  }
  func.func @transform_4(%arg0: i32) -> (i32, i32, i32) {
    %c0_i32 = arith.constant 0 : i32
    %c0_i32_0 = arith.constant 0 : i32
    %c0_i32_1 = arith.constant 0 : i32
    return %arg0, %c0_i32, %c0_i32_0 : i32, i32, i32
  }
}

</mosaic_0001>

<llo_original>
// kernel: tpu_custom_call.1
$region0: #{tpu_custom_call.1}
  #allocation0 [shape = 'u32[]', space=smem, size = 0x4, offset = 0x4, fixed_abs, tag = 'smem constant byte address 0x4 - core index']
  #allocation1 [shape = 'u32[144,128]{1,0:T(1,128)}', space=vmem, size = 0x12000, scoped, tag = 'internal scratch']
  %s0 = inlined_call_operand.hbm [shape: f32[16,256], index: 0, kind: input, shape index: {}]
  %s1 = inlined_call_operand.hbm [shape: f32[16,256], index: 1, kind: input, shape index: {}]
  %s2 = inlined_call_operand.hbm [shape: f32[16,128], index: 2, kind: input, shape index: {}]
  %s3 = inlined_call_operand.hbm [shape: f32[16,128], index: 3, kind: input, shape index: {}]
  %s4 = inlined_call_operand.hbm [shape: f32[2,8,128], index: 4, kind: output, shape index: {}]
  %s5 = sld [smem:[#allocation0]]
  $region65: #{tpu_custom_call.1} parent=0
    _
  %s7 = ssub.s32 1, %s5
  %s8 = scalar_select 0, %s7, %s5
  $region1: #{tpu_custom_call.1} parent=0
    #allocation2 [shape = 'u8[16384]{0}', space=vmem, size = 0x4000, scoped, tag = 'input window, operand 0']
    #allocation3 [shape = 's32[2]{0}', space=sflag, size = 0x8, scoped, tag = 'scoped memory for tpu_custom_call.1']
    #allocation4 [shape = 's32[2]{0}', space=sflag, size = 0x8, scoped, tag = 'scoped memory for tpu_custom_call.1']
    #allocation5 [shape = 'u8[16384]{0}', space=vmem, size = 0x4000, scoped, tag = 'input window, operand 1']
    #allocation6 [shape = 's32[2]{0}', space=sflag, size = 0x8, scoped, tag = 'scoped memory for tpu_custom_call.1']
    #allocation7 [shape = 'u8[8192]{0}', space=vmem, size = 0x2000, scoped, tag = 'input window, operand 2']
    #allocation8 [shape = 'u8[8192]{0}', space=vmem, size = 0x2000, scoped, tag = 'input window, operand 3']
    #allocation9 [shape = 's32[2]{0}', space=sflag, size = 0x8, scoped, tag = 'scoped memory for tpu_custom_call.1']
    #allocation10 [shape = 'u8[8192]{0}', space=vmem, size = 0x2000, scoped, tag = 'output window, operand 0']
    %9 = vsyncpa [#allocation3], 0
    %s10 = scalar_lea.sflag [#allocation3], 1
    %11 = vsyncpa %s10, 0
    %12 = vsyncpa [#allocation6], 0
    %s13 = scalar_lea.sflag [#allocation6], 1
    %14 = vsyncpa %s13, 0
    %15 = vsyncpa [#allocation9], 0
    %s16 = scalar_lea.sflag [#allocation9], 1
    %17 = vsyncpa %s16, 0
    %18 = vsyncpa [#allocation4], 0
    %s19 = scalar_lea.sflag [#allocation4], 1
    %20 = vsyncpa %s19, 0
    loop: start=0, step=1, limit=4
    $region2: #{tpu_custom_call.1} parent=1 // loop_pre_header
      _
    $region3: #{tpu_custom_call.1} parent=1 // loop_header
      %s22 = sphi 0, %s26
      %p23 = scmp.ge.s32.totalorder %s22, 4
      %s32 = sphi 0, %s34
      %s35 = sphi 0, %s32
      %s36 = sphi 0, %s35
      %s52 = sphi 0, %s36
      %s58 = sphi 0, %s60
      %s61 = sphi 0, %s58
      %s62 = sphi 0, %s61
      %s78 = sphi 0, %s62
      %s84 = sphi 0, %s86
      %s87 = sphi 0, %s84
      %s88 = sphi 0, %s87
      %s104 = sphi 0, %s88
      %s110 = sphi 0, %s112
      %s113 = sphi 0, %s110
      %s114 = sphi 0, %s113
      %s130 = sphi 0, %s114
      %s136 = sphi 0, %s138
      %s139 = sphi 0, %s136
      %s140 = sphi 0, %s139
      %s156 = sphi 0, %s140
    $region4: #{tpu_custom_call.1} parent=1 // loop_header_branch
      %25 = sbr.rel (%p23) target = $region8
    $region5: #{tpu_custom_call.1} parent=1 // loop_body
      %s27 = ssub.s32 %s22, 1
      %s28 = ssub.s32 %s22, 2
      %s29 = sadd.s32 %s22, 1
      %s30 = ssub.s32 %s22, %s29
      %p31 = scmp.eq.s32.totalorder %s30, 0
      %s33 = sadd.s32 %s32, 1
      %s34 = scalar_select %p31, %s32, %s33
      %p37 = pneg %p31
      %p38 = scmp.eq.s32.totalorder %s22, 1
      %p39 = por %p37, %p38
      %p40 = scmp.ne.s32.totalorder %s32, %s35
      %p41 = scmp.eq.s32.totalorder %s22, 0
      %p42 = por %p40, %p41
      %p43 = scmp.ne.s32.totalorder %s32, %s35
      %p44 = scmp.eq.s32.totalorder %s27, 1
      %p45 = por %p43, %p44
      %p46 = scmp.ne.s32.totalorder %s35, %s36
      %p47 = scmp.eq.s32.totalorder %s27, 0
      %p48 = por %p46, %p47
      %p49 = scmp.ne.s32.totalorder %s35, %s36
      %p50 = scmp.eq.s32.totalorder %s28, 1
      %p51 = por %p49, %p50
      %p53 = scmp.ne.s32.totalorder %s36, %s52
      %p54 = scmp.eq.s32.totalorder %s28, 0
      %p55 = por %p53, %p54
      %s56 = ssub.s32 %s22, %s29
      %p57 = scmp.eq.s32.totalorder %s56, 0
      %s59 = sadd.s32 %s58, 1
      %s60 = scalar_select %p57, %s58, %s59
      %p63 = pneg %p57
      %p64 = scmp.eq.s32.totalorder %s22, 1
      %p65 = por %p63, %p64
      %p66 = scmp.ne.s32.totalorder %s58, %s61
      %p67 = scmp.eq.s32.totalorder %s22, 0
      %p68 = por %p66, %p67
      %p69 = scmp.ne.s32.totalorder %s58, %s61
      %p70 = scmp.eq.s32.totalorder %s27, 1
      %p71 = por %p69, %p70
      %p72 = scmp.ne.s32.totalorder %s61, %s62
      %p73 = scmp.eq.s32.totalorder %s27, 0
      %p74 = por %p72, %p73
      %p75 = scmp.ne.s32.totalorder %s61, %s62
      %p76 = scmp.eq.s32.totalorder %s28, 1
      %p77 = por %p75, %p76
      %p79 = scmp.ne.s32.totalorder %s62, %s78
      %p80 = scmp.eq.s32.totalorder %s28, 0
      %p81 = por %p79, %p80
      %s82 = ssub.s32 %s22, %s29
      %p83 = scmp.eq.s32.totalorder %s82, 0
      %s85 = sadd.s32 %s84, 1
      %s86 = scalar_select %p83, %s84, %s85
      %p89 = pneg %p83
      %p90 = scmp.eq.s32.totalorder %s22, 1
      %p91 = por %p89, %p90
      %p92 = scmp.ne.s32.totalorder %s84, %s87
      %p93 = scmp.eq.s32.totalorder %s22, 0
      %p94 = por %p92, %p93
      %p95 = scmp.ne.s32.totalorder %s84, %s87
      %p96 = scmp.eq.s32.totalorder %s27, 1
      %p97 = por %p95, %p96
      %p98 = scmp.ne.s32.totalorder %s87, %s88
      %p99 = scmp.eq.s32.totalorder %s27, 0
      %p100 = por %p98, %p99
      %p101 = scmp.ne.s32.totalorder %s87, %s88
      %p102 = scmp.eq.s32.totalorder %s28, 1
      %p103 = por %p101, %p102
      %p105 = scmp.ne.s32.totalorder %s88, %s104
      %p106 = scmp.eq.s32.totalorder %s28, 0
      %p107 = por %p105, %p106
      %s108 = ssub.s32 %s22, %s29
      %p109 = scmp.eq.s32.totalorder %s108, 0
      %s111 = sadd.s32 %s110, 1
      %s112 = scalar_select %p109, %s110, %s111
      %p115 = pneg %p109
      %p116 = scmp.eq.s32.totalorder %s22, 1
      %p117 = por %p115, %p116
      %p118 = scmp.ne.s32.totalorder %s110, %s113
      %p119 = scmp.eq.s32.totalorder %s22, 0
      %p120 = por %p118, %p119
      %p121 = scmp.ne.s32.totalorder %s110, %s113
      %p122 = scmp.eq.s32.totalorder %s27, 1
      %p123 = por %p121, %p122
      %p124 = scmp.ne.s32.totalorder %s113, %s114
      %p125 = scmp.eq.s32.totalorder %s27, 0
      %p126 = por %p124, %p125
      %p127 = scmp.ne.s32.totalorder %s113, %s114
      %p128 = scmp.eq.s32.totalorder %s28, 1
      %p129 = por %p127, %p128
      %p131 = scmp.ne.s32.totalorder %s114, %s130
      %p132 = scmp.eq.s32.totalorder %s28, 0
      %p133 = por %p131, %p132
      %s134 = ssub.s32 %s22, %s29
      %p135 = scmp.eq.s32.totalorder %s134, 0
      %s137 = sadd.s32 %s136, 1
      %s138 = scalar_select %p135, %s136, %s137
      %p141 = pneg %p135
      %p142 = scmp.eq.s32.totalorder %s22, 1
      %p143 = por %p141, %p142
      %p144 = scmp.ne.s32.totalorder %s136, %s139
      %p145 = scmp.eq.s32.totalorder %s22, 0
      %p146 = por %p144, %p145
      %p147 = scmp.ne.s32.totalorder %s136, %s139
      %p148 = scmp.eq.s32.totalorder %s27, 1
      %p149 = por %p147, %p148
      %p150 = scmp.ne.s32.totalorder %s139, %s140
      %p151 = scmp.eq.s32.totalorder %s27, 0
      %p152 = por %p150, %p151
      %p153 = scmp.ne.s32.totalorder %s139, %s140
      %p154 = scmp.eq.s32.totalorder %s28, 1
      %p155 = por %p153, %p154
      %p157 = scmp.ne.s32.totalorder %s140, %s156
      %p158 = scmp.eq.s32.totalorder %s28, 0
      %p159 = por %p157, %p158
      %p160 = scmp.le.s32.totalorder 1, %s22
      %p161 = scmp.lt.s32.totalorder %s22, 3
      %p162 = pnand %p160, %p161
      %p163 = pneg %p162
      // Predicated region
      $region9: #{tpu_custom_call.1} parent=5 // pred_check
        _
      $region10: #{tpu_custom_call.1} parent=5 // pred_check_branch
        %165 = sbr.rel (%p162) target = $region12
      $region11: #{tpu_custom_call.1} parent=5 // pred_region
        %s166 = ssub.s32 %s22, 1
      $region12: #{tpu_custom_call.1} parent=5 // pred_fallthru
        _
      %p167 = scmp.lt.s32.totalorder %s22, 2
      // Predicated region
      $region13: #{tpu_custom_call.1} parent=5 // pred_check
        %p168 = pneg %p167
      $region14: #{tpu_custom_call.1} parent=5 // pred_check_branch
        %170 = sbr.rel (%p168) target = $region16
      $region15: #{tpu_custom_call.1} parent=5 // pred_region
        // Predicated region
        $region17: #{tpu_custom_call.1} parent=15 // pred_check
          %p171 = pneg %p42
        $region18: #{tpu_custom_call.1} parent=15 // pred_check_branch
          %173 = sbr.rel (%p171) target = $region20
        $region19: #{tpu_custom_call.1} parent=15 // pred_region
          %s174 = sand.u32 %s32, 1
          %s175 = scalar_lea.sflag [#allocation3], %s174
          %s176 = sand.u32 %s32, 1
          %s177 = smul.addr %s176, 16
          %s178 = scalar_lea.vmem [#allocation2], %s177
          %s180 = ssub.s32 256, 256
          %181 = vsyncadd %s175, %s180
          %s182 = smul.addr %s22, 2
          %s183 = smul.addr %s182, 128
          %s184 = scalar_lea.hbm %s0, %s183
          %s186 = sshll.u32 %s178, 4
          %s187 = int_to_ptr.vmem [resolvable:$true] %s186
          %189 = dma.hbm_to_vmem [thread:$0]  %s184, 256, %s187, %s175
        $region20: #{tpu_custom_call.1} parent=15 // pred_fallthru
          _
        // Predicated region
        $region21: #{tpu_custom_call.1} parent=15 // pred_check
          %p190 = pneg %p68
        $region22: #{tpu_custom_call.1} parent=15 // pred_check_branch
          %192 = sbr.rel (%p190) target = $region24
        $region23: #{tpu_custom_call.1} parent=15 // pred_region
          %s193 = sand.u32 %s22, 1
          %s194 = scalar_lea.sflag [#allocation6], %s193
          %s195 = sand.u32 %s58, 1
          %s196 = smul.addr %s195, 16
          %s197 = scalar_lea.vmem [#allocation5], %s196
          %s199 = ssub.s32 256, 256
          %200 = vsyncadd %s194, %s199
          %s201 = smul.addr %s22, 2
          %s202 = smul.addr %s201, 128
          %s203 = scalar_lea.hbm %s1, %s202
          %s205 = sshll.u32 %s197, 4
          %s206 = int_to_ptr.vmem [resolvable:$true] %s205
          %208 = dma.hbm_to_vmem [thread:$0]  %s203, 256, %s206, %s194
        $region24: #{tpu_custom_call.1} parent=15 // pred_fallthru
          _
        // Predicated region
        $region25: #{tpu_custom_call.1} parent=15 // pred_check
          %p209 = pneg %p94
        $region26: #{tpu_custom_call.1} parent=15 // pred_check_branch
          %211 = sbr.rel (%p209) target = $region28
        $region27: #{tpu_custom_call.1} parent=15 // pred_region
          %s212 = sand.u32 %s22, 1
          %s213 = scalar_lea.sflag [#allocation6], %s212
          %s214 = sand.u32 %s84, 1
          %s215 = smul.addr %s214, 8
          %s216 = scalar_lea.vmem [#allocation7], %s215
          %s218 = ssub.s32 128, 128
          %219 = vsyncadd %s213, %s218
          %s220 = smul.addr %s22, 128
          %s221 = scalar_lea.hbm %s2, %s220
          %s223 = sshll.u32 %s216, 4
          %s224 = int_to_ptr.vmem [resolvable:$true] %s223
          %226 = dma.hbm_to_vmem [thread:$0]  %s221, 128, %s224, %s213
        $region28: #{tpu_custom_call.1} parent=15 // pred_fallthru
          _
        // Predicated region
        $region29: #{tpu_custom_call.1} parent=15 // pred_check
          %p227 = pneg %p120
        $region30: #{tpu_custom_call.1} parent=15 // pred_check_branch
          %229 = sbr.rel (%p227) target = $region32
        $region31: #{tpu_custom_call.1} parent=15 // pred_region
          %s230 = sand.u32 %s110, 1
          %s231 = scalar_lea.sflag [#allocation9], %s230
          %s232 = sand.u32 %s110, 1
          %s233 = smul.addr %s232, 8
          %s234 = scalar_lea.vmem [#allocation8], %s233
          %s236 = ssub.s32 128, 128
          %237 = vsyncadd %s231, %s236
          %s238 = smul.addr %s22, 128
          %s239 = scalar_lea.hbm %s3, %s238
          %s241 = sshll.u32 %s234, 4
          %s242 = int_to_ptr.vmem [resolvable:$true] %s241
          %244 = dma.hbm_to_vmem [thread:$0]  %s239, 128, %s242, %s231
        $region32: #{tpu_custom_call.1} parent=15 // pred_fallthru
          _
      $region16: #{tpu_custom_call.1} parent=5 // pred_fallthru
        _
      %p245 = scmp.le.s32.totalorder 1, %s22
      %p246 = scmp.lt.s32.totalorder %s22, 3
      %p247 = pnand %p245, %p246
      %p248 = pneg %p247
      // Predicated region
      $region33: #{tpu_custom_call.1} parent=5 // pred_check
        _
      $region34: #{tpu_custom_call.1} parent=5 // pred_check_branch
        %250 = sbr.rel (%p247) target = $region36
      $region35: #{tpu_custom_call.1} parent=5 // pred_region
        %s251 = ssub.s32 %s22, 1
        %s252 = sand.u32 %s35, 1
        %s253 = scalar_lea.sflag [#allocation3], %s252
        %s254 = sand.u32 %s35, 1
        %s255 = smul.addr %s254, 16
        %s256 = scalar_lea.vmem [#allocation2], %s255
        // Predicated region
        $region37: #{tpu_custom_call.1} parent=35 // pred_check
          %p257 = pneg %p48
        $region38: #{tpu_custom_call.1} parent=35 // pred_check_branch
          %259 = sbr.rel (%p257) target = $region40
        $region39: #{tpu_custom_call.1} parent=35 // pred_region
          %260 = dma.done %s253, 256
        $region40: #{tpu_custom_call.1} parent=35 // pred_fallthru
          _
        %s261 = sand.u32 %s27, 1
        %s262 = scalar_lea.sflag [#allocation6], %s261
        %s263 = sand.u32 %s61, 1
        %s264 = smul.addr %s263, 16
        %s265 = scalar_lea.vmem [#allocation5], %s264
        // Predicated region
        $region41: #{tpu_custom_call.1} parent=35 // pred_check
          %p266 = pneg %p74
        $region42: #{tpu_custom_call.1} parent=35 // pred_check_branch
          %268 = sbr.rel (%p266) target = $region44
        $region43: #{tpu_custom_call.1} parent=35 // pred_region
          %269 = dma.done %s262, 256
        $region44: #{tpu_custom_call.1} parent=35 // pred_fallthru
          _
        %s270 = sand.u32 %s27, 1
        %s271 = scalar_lea.sflag [#allocation6], %s270
        %s272 = sand.u32 %s87, 1
        %s273 = smul.addr %s272, 8
        %s274 = scalar_lea.vmem [#allocation7], %s273
        // Predicated region
        $region45: #{tpu_custom_call.1} parent=35 // pred_check
          %p275 = pneg %p100
        $region46: #{tpu_custom_call.1} parent=35 // pred_check_branch
          %277 = sbr.rel (%p275) target = $region48
        $region47: #{tpu_custom_call.1} parent=35 // pred_region
          %278 = dma.done %s271, 128
        $region48: #{tpu_custom_call.1} parent=35 // pred_fallthru
          _
        %s279 = sand.u32 %s113, 1
        %s280 = scalar_lea.sflag [#allocation9], %s279
        %s281 = sand.u32 %s113, 1
        %s282 = smul.addr %s281, 8
        %s283 = scalar_lea.vmem [#allocation8], %s282
        // Predicated region
        $region49: #{tpu_custom_call.1} parent=35 // pred_check
          %p284 = pneg %p126
        $region50: #{tpu_custom_call.1} parent=35 // pred_check_branch
          %286 = sbr.rel (%p284) target = $region52
        $region51: #{tpu_custom_call.1} parent=35 // pred_region
          %287 = dma.done %s280, 128
        $region52: #{tpu_custom_call.1} parent=35 // pred_fallthru
          _
        %s288 = sand.u32 %s35, 1
        %s289 = scalar_lea.sflag [#allocation3], %s288
        %s290 = sand.u32 %s35, 1
        %s291 = smul.addr %s290, 16
        %s292 = scalar_lea.vmem [#allocation2], %s291
        %p293 = pneg %p48
        %p294 = pneg %p45
        %s295 = sand.u32 %s27, 1
        %s296 = scalar_lea.sflag [#allocation6], %s295
        %s297 = sand.u32 %s61, 1
        %s298 = smul.addr %s297, 16
        %s299 = scalar_lea.vmem [#allocation5], %s298
        %p300 = pneg %p74
        %p301 = pneg %p71
        %s302 = sand.u32 %s27, 1
        %s303 = scalar_lea.sflag [#allocation6], %s302
        %s304 = sand.u32 %s87, 1
        %s305 = smul.addr %s304, 8
        %s306 = scalar_lea.vmem [#allocation7], %s305
        %p307 = pneg %p100
        %p308 = pneg %p97
        %s309 = sand.u32 %s113, 1
        %s310 = scalar_lea.sflag [#allocation9], %s309
        %s311 = sand.u32 %s113, 1
        %s312 = smul.addr %s311, 8
        %s313 = scalar_lea.vmem [#allocation8], %s312
        %p314 = pneg %p126
        %p315 = pneg %p123
        %p316 = pneg %p152
        %p317 = pneg %p149
        %s318 = sand.u32 %s139, 1
        %s319 = scalar_lea.sflag [#allocation4], %s318
        %s320 = sand.u32 %s139, 1
        %s321 = smul.addr %s320, 8
        %s322 = scalar_lea.vmem [#allocation10], %s321
        %v323 = vld [vmem:[%s256] sm:$0xff]
        %v324 = vld [vmem:[%s256 + $0x8] sm:$0xff]
        %v325 = vld [vmem:[%s265] sm:$0xff]
        %v326 = vld [vmem:[%s265 + $0x8] sm:$0xff]
        %v327 = vld [vmem:[%s274] sm:$0xff]
        %v328 = vld [vmem:[%s283] sm:$0xff]
        %v329 = vlog2.pop %v323
        %v330 = vmul.f32 %v329, 0.6931472
        %v331 = vlog2.pop %v324
        %v332 = vmul.f32 %v331, 0.6931472
        %v333 = vmax.f32 %v330, -100.0
        %v334 = vmax.f32 %v332, -100.0
        %v335 = vsub.f32 1.0, %v323
        %v336 = vsub.f32 1.0, %v324
        %v337 = vlog2.pop %v335
        %v338 = vmul.f32 %v337, 0.6931472
        %v339 = vlog2.pop %v336
        %v340 = vmul.f32 %v339, 0.6931472
        %v341 = vmax.f32 %v338, -100.0
        %v342 = vmax.f32 %v340, -100.0
        %v343 = vsub.f32 %v333, %v341
        %v344 = vsub.f32 %v334, %v342
        %v345 = vmul.f32 %v325, %v343
        %v346 = vmul.f32 %v326, %v344
        %v347 = vadd.f32 %v341, %v345
        %v348 = vadd.f32 %v342, %v346
        %v349 = vadd.f32 %v347, %v348
        %350 = vadd.xlane.f32.xlu0 %v349
        %v351 = vpop.xlane.xlu0 %350
        %v352 = vrot.slane %v351, 4
        %v353 = vadd.f32 %v351, %v352
        %v354 = vrot.slane %v353, 2
        %v355 = vadd.f32 %v353, %v354
        %v356 = vrot.slane %v355, 1
        %v357 = vadd.f32 %v355, %v356
        %s358 = vtos %v357
        %s359 = ssub.f32 0.0, %s358
        %v360 = vmul.f32 %v328, %v328
        %v361 = vlog2.pop %v360
        %v362 = vmul.f32 %v361, 0.6931472
        %v363 = vadd.f32 %v362, 1.0
        %v364 = vmul.f32 %v327, %v327
        %v365 = vsub.f32 %v363, %v364
        %v366 = vsub.f32 %v365, %v360
        %367 = vadd.xlane.f32.xlu0 %v366
        %v368 = vpop.xlane.xlu0 %367
        %v369 = vrot.slane %v368, 4
        %v370 = vadd.f32 %v368, %v369
        %v371 = vrot.slane %v370, 2
        %v372 = vadd.f32 %v370, %v371
        %v373 = vrot.slane %v372, 1
        %v374 = vadd.f32 %v372, %v373
        %s375 = vtos %v374
        %s376 = smul.f32 %s375, -0.5
        %v377 = vlaneseq
        %v378 = vshrl.u32 %v377, 7
        %v379 = vlaneseq
        %v380 = vand.u32 %v379, 127
        %vm381 = vcmp.eq.s32.totalorder %v378, 0
        %vm382 = vcmp.eq.s32.totalorder %v380, 0
        %vm383 = vmand %vm381, %vm382
        %v384 = vstv %s359
        %v385 = vsel %vm383, %v384, 0.0
        %vm386 = vcmp.eq.s32.totalorder %v380, 1
        %vm387 = vmand %vm381, %vm386
        %v388 = vstv %s376
        %v389 = vsel %vm387, %v388, 0.0
        %v390 = vadd.f32 %v385, %v389
        %391 = vst [vmem:[%s322] sm:$0xff] %v390
        %s392 = sand.u32 %s139, 1
        %s393 = scalar_lea.sflag [#allocation4], %s392
        %s394 = sand.u32 %s139, 1
        %s395 = smul.addr %s394, 8
        %s396 = scalar_lea.vmem [#allocation10], %s395
        // Predicated region
        $region53: #{tpu_custom_call.1} parent=35 // pred_check
          %p397 = pneg %p149
        $region54: #{tpu_custom_call.1} parent=35 // pred_check_branch
          %399 = sbr.rel (%p397) target = $region56
        $region55: #{tpu_custom_call.1} parent=35 // pred_region
          %s401 = ssub.s32 128, 128
          %402 = vsyncadd %s393, %s401
          %s403 = smul.addr %s27, 128
          %s404 = scalar_lea.hbm %s4, %s403
          %s406 = sshll.u32 %s396, 4
          %s407 = int_to_ptr.vmem [resolvable:$true] %s406
          %409 = dma.vmem_to_hbm [thread:$0]  %s407, 128, %s404, %s393
        $region56: #{tpu_custom_call.1} parent=35 // pred_fallthru
          _
      $region36: #{tpu_custom_call.1} parent=5 // pred_fallthru
        _
      %p410 = scmp.le.s32.totalorder 2, %s22
      // Predicated region
      $region57: #{tpu_custom_call.1} parent=5 // pred_check
        %p411 = pneg %p410
      $region58: #{tpu_custom_call.1} parent=5 // pred_check_branch
        %413 = sbr.rel (%p411) target = $region60
      $region59: #{tpu_custom_call.1} parent=5 // pred_region
        %s414 = ssub.s32 %s22, 2
        // Predicated region
        $region61: #{tpu_custom_call.1} parent=59 // pred_check
          %p415 = pneg %p155
        $region62: #{tpu_custom_call.1} parent=59 // pred_check_branch
          %417 = sbr.rel (%p415) target = $region64
        $region63: #{tpu_custom_call.1} parent=59 // pred_region
          %s418 = sand.u32 %s140, 1
          %s419 = scalar_lea.sflag [#allocation4], %s418
          %s420 = sand.u32 %s140, 1
          %s421 = smul.addr %s420, 8
          %s422 = scalar_lea.vmem [#allocation10], %s421
          %423 = dma.done %s419, 128
        $region64: #{tpu_custom_call.1} parent=59 // pred_fallthru
          _
      $region60: #{tpu_custom_call.1} parent=5 // pred_fallthru
        _
    $region6: #{tpu_custom_call.1} parent=1 // loop_footer
      %s26 = sadd.s32 1, %s22
    $region7: #{tpu_custom_call.1} parent=1 // loop_footer_branch
      %21 = sbr.rel target = $region3
    $region8: #{tpu_custom_call.1} parent=1 // loop_exit
      _
    %424 = vsyncpa [#allocation3], 1
    %s425 = scalar_lea.sflag [#allocation3], 1
    %426 = vsyncpa %s425, 1
    %427 = vsyncpa [#allocation6], 1
    %s428 = scalar_lea.sflag [#allocation6], 1
    %429 = vsyncpa %s428, 1
    %430 = vsyncpa [#allocation9], 1
    %s431 = scalar_lea.sflag [#allocation9], 1
    %432 = vsyncpa %s431, 1
    %433 = vsyncpa [#allocation4], 1
    %s434 = scalar_lea.sflag [#allocation4], 1
    %435 = vsyncpa %s434, 1

</llo_original>
